<compile_context>
chip_gen: v6e
topology: v6e:2x2x1
jax: 0.10.0
libtpu: 0.0.40
codegen_flags: <defaults>
</compile_context>

<pallas_src>
import jax
import jax.numpy as jnp
import jax.scipy.linalg
from jax.experimental import pallas as pl
from jax.experimental.pallas import tpu as pltpu

NOISE_DIM = 10
HIDDEN_DIM = 32
OUT_DIM = 64          # 1 * 8 * 8
PACK = 2              # batch rows packed per lane-dense output row (2*64==128)
MAX_TB = 8192         # batch rows per grid step (multiple of 16*PACK)
SUBLANE_PACK = 16     # bf16 sublane packing -> keep TB/PACK a multiple of 16


def _round_up(n, m):
    return (n + m - 1) // m * m


def prepare_packed_params(params, *, pack=PACK, mxu_dtype=jnp.bfloat16):
    """Fold PACK-way row packing into the weights (block-diagonal) / biases.

    Call once (e.g. outside a training/inference loop); the result can be
    passed to simple_gan_generator via packed_params= to avoid redoing the
    concat/pad work every invocation.
    """
    w1, b1, w2, b2, w3, b3 = params
    wpack = lambda w: jax.scipy.linalg.block_diag(*([w] * pack)).astype(mxu_dtype)
    bpack = lambda b: jnp.concatenate([b] * pack, axis=1).astype(jnp.float32)
    return (wpack(w1), bpack(b1), wpack(w2), bpack(b2), wpack(w3), bpack(b3))


def _gan_mlp_kernel(x_ref, w1_ref, b1_ref, w2_ref, b2_ref, w3_ref, b3_ref,
                    o_ref):
    """3-layer MLP on one batch tile; bf16 MXU operands, f32 accumulation."""
    x = x_ref[...]                                               # (TB/P, P*10) bf16

    h1 = jnp.dot(x, w1_ref[...], preferred_element_type=jnp.float32)
    h1 = jnp.maximum(h1 + b1_ref[...], 0.0)                      # (TB/P, P*32) f32

    h2 = jnp.dot(h1.astype(w2_ref.dtype), w2_ref[...],
                 preferred_element_type=jnp.float32)
    h2 = jnp.maximum(h2 + b2_ref[...], 0.0)                      # (TB/P, P*64) f32

    h3 = jnp.dot(h2.astype(w3_ref.dtype), w3_ref[...],
                 preferred_element_type=jnp.float32)
    o_ref[...] = jnp.tanh(h3 + b3_ref[...]).astype(o_ref.dtype)  # (TB/P, P*64)


def simple_gan_generator(x, params=None, *, tb=MAX_TB, pack=PACK,
                         packed_params=None):
    """x: (B, noise_dim) float32.  Returns (B, 1, 8, 8) float32 (NCHW)."""
    if packed_params is None:
        packed_params = prepare_packed_params(params, pack=pack)
    w1b, b1b, w2b, b2b, w3b, b3b = packed_params

    B = x.shape[0]
    lanes = pack * OUT_DIM                      # 128 (PACK=2) / 256 (PACK=4)

    # Batch tile: multiple of 16*pack so TB/pack keeps bf16 sublane tiling.
    align = SUBLANE_PACK * pack
    tb = _round_up(max(int(tb), align), align)
    # Aim for >=2 grid steps (v7x has 2 TCs; "parallel" axis shards across them).
    B16 = _round_up(B, align)
    tb_target = _round_up(pl.cdiv(B16, 2), align)
    TB = min(tb, tb_target)
    padded_B = _round_up(B, TB)
    grid = (padded_B // TB,)

    if padded_B != B:
        x = jnp.pad(x, ((0, padded_B - B), (0, 0)))

    # Pack `pack` consecutive rows: (padded_B, 10) -> (padded_B/pack, pack*10).
    # Row-major, free; bf16 for the MXU (f32 accumulation inside the kernel).
    x2 = x.reshape(padded_B // pack, pack * NOISE_DIM).astype(w1b.dtype)

    const = lambda shape: pl.BlockSpec(shape, lambda i: (0, 0))

    rows = padded_B // pack
    weight_bytes = sum(int(p.size) * p.dtype.itemsize for p in packed_params)
    cost = pl.CostEstimate(
        flops=int(rows * 2 * (x2.shape[1] * w1b.shape[1]
                              + w2b.shape[0] * w2b.shape[1]
                              + w3b.shape[0] * w3b.shape[1])),
        transcendentals=int(padded_B * OUT_DIM),
        bytes_accessed=int(x2.size * x2.dtype.itemsize
                           + weight_bytes
                           + rows * lanes * 4),
    )

    out = pl.pallas_call(
        _gan_mlp_kernel,
        out_shape=jax.ShapeDtypeStruct((rows, lanes), jnp.float32),
        grid=grid,
        in_specs=[
            pl.BlockSpec((TB // pack, pack * NOISE_DIM), lambda i: (i, 0)),
            const(w1b.shape), const(b1b.shape),
            const(w2b.shape), const(b2b.shape),
            const(w3b.shape), const(b3b.shape),
        ],
        out_specs=pl.BlockSpec((TB // pack, lanes), lambda i: (i, 0)),
        compiler_params=pltpu.CompilerParams(
            dimension_semantics=("parallel",),
            vmem_limit_bytes=32 << 20),
        cost_estimate=cost,
    )(x2, w1b, b1b, w2b, b2b, w3b, b3b)

    # (padded_B/pack, pack*64) row-major == (padded_B, 64); drop pad, NCHW view.
    return out.reshape(padded_B, OUT_DIM)[:B].reshape(-1, 1, 8, 8)


def init_params(key, noise_dim=NOISE_DIM, hidden_dim=HIDDEN_DIM):
    """nn.Linear-style init (uniform +/- 1/sqrt(fan_in)).

    Weights stored as (in_features, out_features), i.e. pre-transposed vs
    PyTorch's (out, in); kernel computes y = x @ W + b == x @ W_pt.T + b.
    """
    dims = [(noise_dim, hidden_dim),
            (hidden_dim, hidden_dim * 2),
            (hidden_dim * 2, OUT_DIM)]
    params = []
    for (fan_in, fan_out) in dims:
        key, kw, kb = jax.random.split(key, 3)
        bound = 1.0 / jnp.sqrt(jnp.float32(fan_in))
        w = jax.random.uniform(kw, (fan_in, fan_out), jnp.float32,
                               minval=-bound, maxval=bound)
        b = jax.random.uniform(kb, (1, fan_out), jnp.float32,
                               minval=-bound, maxval=bound)
        params += [w, b]
    return tuple(params)


def reference_forward(x, params):
    """Plain-JAX f32 reference for correctness checking."""
    w1, b1, w2, b2, w3, b3 = params
    h = jnp.maximum(x @ w1 + b1, 0.0)
    h = jnp.maximum(h @ w2 + b2, 0.0)
    h = jnp.tanh(h @ w3 + b3)
    return h.reshape(-1, 1, 8, 8)


if __name__ == "__main__":
    key = jax.random.PRNGKey(0)
    key, kx, kx2 = jax.random.split(key, 3)
    params = init_params(key)

    # Pack / cast weights once; reuse across calls (perf-review item).
    packed = prepare_packed_params(params)

    # Tolerances are relaxed vs the pure-f32 version because the matmul
    # operands are bf16 (accumulation stays f32); tanh output is in [-1, 1].
    ATOL = 2e-2

    # Small single-tile case (batch=2, padded to one tile).
    batch = 2
    x = jax.random.normal(kx, (batch, NOISE_DIM), dtype=jnp.float32)
    y = jax.block_until_ready(simple_gan_generator(x, packed_params=packed))
    assert y.shape == (batch, 1, 8, 8), y.shape
    assert jnp.allclose(y, reference_forward(x, params), atol=ATOL, rtol=ATOL)

    # Multi-tile case exercising the grid (>=2 steps) + batch padding path.
    batch2 = 40
    xb = jax.random.normal(kx2, (batch2, NOISE_DIM), dtype=jnp.float32)
    yb = jax.block_until_ready(
        simple_gan_generator(xb, packed_params=packed, tb=32))
    assert yb.shape == (batch2, 1, 8, 8), yb.shape
    assert jnp.allclose(yb, reference_forward(xb, params), atol=ATOL, rtol=ATOL)

    print("KERNEL_OK")
</pallas_src>

<mosaic_0001>
module attributes {stable_mosaic.version = 11 : i64} {
  func.func @_gan_mlp_kernel(%arg0: i32, %arg1: memref<16x20xbf16, #tpu.memory_space<vmem>>, %arg2: memref<20x64xbf16, #tpu.memory_space<vmem>>, %arg3: memref<1x64xf32, #tpu.memory_space<vmem>>, %arg4: memref<64x128xbf16, #tpu.memory_space<vmem>>, %arg5: memref<1x128xf32, #tpu.memory_space<vmem>>, %arg6: memref<128x128xbf16, #tpu.memory_space<vmem>>, %arg7: memref<1x128xf32, #tpu.memory_space<vmem>>, %arg8: memref<16x128xf32, #tpu.memory_space<vmem>>) attributes {dimension_semantics = [#tpu.dimension_semantics<parallel>], iteration_bounds = array<i64: 1>, scalar_prefetch = 0 : i64, scratch_operands = 0 : i64, tpu.core_type = #tpu.core_type<tc>, window_params = [{transform_indices = @transform_0, window_bounds = array<i64: 16, 20>}, {pipeline_mode = #tpu.pipeline_mode<synchronous>, transform_indices = @transform_1, window_bounds = array<i64: 20, 64>}, {pipeline_mode = #tpu.pipeline_mode<synchronous>, transform_indices = @transform_2, window_bounds = array<i64: 1, 64>}, {pipeline_mode = #tpu.pipeline_mode<synchronous>, transform_indices = @transform_3, window_bounds = array<i64: 64, 128>}, {pipeline_mode = #tpu.pipeline_mode<synchronous>, transform_indices = @transform_4, window_bounds = array<i64: 1, 128>}, {pipeline_mode = #tpu.pipeline_mode<synchronous>, transform_indices = @transform_5, window_bounds = array<i64: 128, 128>}, {pipeline_mode = #tpu.pipeline_mode<synchronous>, transform_indices = @transform_6, window_bounds = array<i64: 1, 128>}, {transform_indices = @transform_7, window_bounds = array<i64: 16, 128>}]} {
    %c0 = arith.constant 0 : index
    %c0_0 = arith.constant 0 : index
    %0 = vector.load %arg1[%c0, %c0_0] : memref<16x20xbf16, #tpu.memory_space<vmem>>, vector<16x20xbf16>
    %c0_1 = arith.constant 0 : index
    %c0_2 = arith.constant 0 : index
    %1 = vector.load %arg2[%c0_1, %c0_2] : memref<20x64xbf16, #tpu.memory_space<vmem>>, vector<20x64xbf16>
    %cst = arith.constant dense<0.000000e+00> : vector<16x64xf32>
    %2 = tpu.matmul %0, %1, %cst {dimension_numbers = #tpu.dot_dimension_numbers<[1], [0], [0], [1], [0, 0, 1, 1], [], []>} : vector<16x20xbf16>, vector<20x64xbf16>, vector<16x64xf32> -> vector<16x64xf32>
    %c0_3 = arith.constant 0 : index
    %c0_4 = arith.constant 0 : index
    %3 = vector.load %arg3[%c0_3, %c0_4] : memref<1x64xf32, #tpu.memory_space<vmem>>, vector<1x64xf32>
    %4 = vector.broadcast %3 : vector<1x64xf32> to vector<16x64xf32>
    %5 = arith.addf %2, %4 : vector<16x64xf32>
    %cst_5 = arith.constant 0.000000e+00 : f32
    %6 = vector.broadcast %cst_5 : f32 to vector<16x64xf32>
    %7 = arith.maximumf %5, %6 : vector<16x64xf32>
    %8 = arith.truncf %7 : vector<16x64xf32> to vector<16x64xbf16>
    %c0_6 = arith.constant 0 : index
    %c0_7 = arith.constant 0 : index
    %9 = vector.load %arg4[%c0_6, %c0_7] : memref<64x128xbf16, #tpu.memory_space<vmem>>, vector<64x128xbf16>
    %cst_8 = arith.constant dense<0.000000e+00> : vector<16x128xf32>
    %10 = tpu.matmul %8, %9, %cst_8 {dimension_numbers = #tpu.dot_dimension_numbers<[1], [0], [0], [1], [0, 0, 1, 1], [], []>} : vector<16x64xbf16>, vector<64x128xbf16>, vector<16x128xf32> -> vector<16x128xf32>
    %c0_9 = arith.constant 0 : index
    %c0_10 = arith.constant 0 : index
    %11 = vector.load %arg5[%c0_9, %c0_10] : memref<1x128xf32, #tpu.memory_space<vmem>>, vector<1x128xf32>
    %12 = vector.broadcast %11 : vector<1x128xf32> to vector<16x128xf32>
    %13 = arith.addf %10, %12 : vector<16x128xf32>
    %cst_11 = arith.constant 0.000000e+00 : f32
    %14 = vector.broadcast %cst_11 : f32 to vector<16x128xf32>
    %15 = arith.maximumf %13, %14 : vector<16x128xf32>
    %16 = arith.truncf %15 : vector<16x128xf32> to vector<16x128xbf16>
    %c0_12 = arith.constant 0 : index
    %c0_13 = arith.constant 0 : index
    %17 = vector.load %arg6[%c0_12, %c0_13] : memref<128x128xbf16, #tpu.memory_space<vmem>>, vector<128x128xbf16>
    %cst_14 = arith.constant dense<0.000000e+00> : vector<16x128xf32>
    %18 = tpu.matmul %16, %17, %cst_14 {dimension_numbers = #tpu.dot_dimension_numbers<[1], [0], [0], [1], [0, 0, 1, 1], [], []>} : vector<16x128xbf16>, vector<128x128xbf16>, vector<16x128xf32> -> vector<16x128xf32>
    %c0_15 = arith.constant 0 : index
    %c0_16 = arith.constant 0 : index
    %19 = vector.load %arg7[%c0_15, %c0_16] : memref<1x128xf32, #tpu.memory_space<vmem>>, vector<1x128xf32>
    %20 = vector.broadcast %19 : vector<1x128xf32> to vector<16x128xf32>
    %21 = arith.addf %18, %20 : vector<16x128xf32>
    %22 = math.tanh %21 : vector<16x128xf32>
    %c0_17 = arith.constant 0 : index
    %c0_18 = arith.constant 0 : index
    %23 = vector.load %arg8[%c0_17, %c0_18] : memref<16x128xf32, #tpu.memory_space<vmem>>, vector<16x128xf32>
    tpu.vector_store %arg8[%c0_17, %c0_18], %22 {strides = array<i32>} : memref<16x128xf32, #tpu.memory_space<vmem>>, vector<16x128xf32>,
    return
  }
  func.func @transform_0(%arg0: i32) -> (i32, i32) {
    %c0_i32 = arith.constant 0 : i32
    %c0_i32_0 = arith.constant 0 : i32
    return %arg0, %c0_i32 : i32, i32
  }
  func.func @transform_1(%arg0: i32) -> (i32, i32) {
    %c0_i32 = arith.constant 0 : i32
    %c0_i32_0 = arith.constant 0 : i32
    %c0_i32_1 = arith.constant 0 : i32
    return %c0_i32, %c0_i32_0 : i32, i32
  }
  func.func @transform_2(%arg0: i32) -> (i32, i32) {
    %c0_i32 = arith.constant 0 : i32
    %c0_i32_0 = arith.constant 0 : i32
    %c0_i32_1 = arith.constant 0 : i32
    return %c0_i32, %c0_i32_0 : i32, i32
  }
  func.func @transform_3(%arg0: i32) -> (i32, i32) {
    %c0_i32 = arith.constant 0 : i32
    %c0_i32_0 = arith.constant 0 : i32
    %c0_i32_1 = arith.constant 0 : i32
    return %c0_i32, %c0_i32_0 : i32, i32
  }
  func.func @transform_4(%arg0: i32) -> (i32, i32) {
    %c0_i32 = arith.constant 0 : i32
    %c0_i32_0 = arith.constant 0 : i32
    %c0_i32_1 = arith.constant 0 : i32
    return %c0_i32, %c0_i32_0 : i32, i32
  }
  func.func @transform_5(%arg0: i32) -> (i32, i32) {
    %c0_i32 = arith.constant 0 : i32
    %c0_i32_0 = arith.constant 0 : i32
    %c0_i32_1 = arith.constant 0 : i32
    return %c0_i32, %c0_i32_0 : i32, i32
  }
  func.func @transform_6(%arg0: i32) -> (i32, i32) {
    %c0_i32 = arith.constant 0 : i32
    %c0_i32_0 = arith.constant 0 : i32
    %c0_i32_1 = arith.constant 0 : i32
    return %c0_i32, %c0_i32_0 : i32, i32
  }
  func.func @transform_7(%arg0: i32) -> (i32, i32) {
    %c0_i32 = arith.constant 0 : i32
    %c0_i32_0 = arith.constant 0 : i32
    return %arg0, %c0_i32 : i32, i32
  }
}

</mosaic_0001>

<llo_original>
// kernel: tpu_custom_call.1
$region0: #{tpu_custom_call.1}
  #allocation0 [shape = 'u32[]', space=smem, size = 0x4, offset = 0x4, fixed_abs, tag = 'smem constant byte address 0x4 - core index']
  #allocation1 [shape = 'u32[144,128]{1,0:T(1,128)}', space=vmem, size = 0x12000, scoped, tag = 'internal scratch']
  %s0 = inlined_call_operand.hbm [shape: bf16[16,20], index: 0, kind: input, shape index: {}]
  %s1 = inlined_call_operand.hbm [shape: bf16[20,64], index: 1, kind: input, shape index: {}]
  %s2 = inlined_call_operand.vmem [shape: f32[1,64], index: 2, kind: input, shape index: {}]
  %s3 = inlined_call_operand.hbm [shape: bf16[64,128], index: 3, kind: input, shape index: {}]
  %s4 = inlined_call_operand.vmem [shape: f32[1,128], index: 4, kind: input, shape index: {}]
  %s5 = inlined_call_operand.hbm [shape: bf16[128,128], index: 5, kind: input, shape index: {}]
  %s6 = inlined_call_operand.vmem [shape: f32[1,128], index: 6, kind: input, shape index: {}]
  %s7 = inlined_call_operand.hbm [shape: f32[16,128], index: 7, kind: output, shape index: {}]
  %s8 = sld [smem:[#allocation0]]
  $region54: #{tpu_custom_call.1} parent=0
    _
  %s10 = ssub.s32 1, %s8
  %s11 = scalar_select 0, %s10, %s8
  $region1: #{tpu_custom_call.1} parent=0
    #allocation2 [shape = 'u8[4096]{0}', space=vmem, size = 0x1000, scoped, tag = 'input window, operand 0, single buffered']
    #allocation3 [shape = 's32[1]{0}', space=sflag, size = 0x4, scoped, tag = 'scoped memory for tpu_custom_call.1']
    #allocation4 [shape = 's32[1]{0}', space=sflag, size = 0x4, scoped, tag = 'scoped memory for tpu_custom_call.1']
    #allocation5 [shape = 'u8[6144]{0}', space=vmem, size = 0x1800, scoped, tag = 'input window, operand 1, single buffered']
    #allocation6 [shape = 's32[1]{0}', space=sflag, size = 0x4, scoped, tag = 'scoped memory for tpu_custom_call.1']
    #allocation7 [shape = 'u8[16384]{0}', space=vmem, size = 0x4000, scoped, tag = 'input window, operand 3, single buffered']
    #allocation8 [shape = 'u8[32768]{0}', space=vmem, size = 0x8000, scoped, tag = 'input window, operand 5, single buffered']
    #allocation9 [shape = 's32[1]{0}', space=sflag, size = 0x4, scoped, tag = 'scoped memory for tpu_custom_call.1']
    #allocation10 [shape = 'u8[8192]{0}', space=vmem, size = 0x2000, scoped, tag = 'output window, operand 0, single buffered']
    %12 = vsyncpa [#allocation3], 0
    %13 = vsyncpa [#allocation6], 0
    %14 = vsyncpa [#allocation9], 0
    %15 = vsyncpa [#allocation4], 0
    // Predicated region
    $region2: #{tpu_custom_call.1} parent=1 // pred_check
      _
    $region3: #{tpu_custom_call.1} parent=1 // pred_check_branch
      %17 = sbr.rel (0) target = $region5
    $region4: #{tpu_custom_call.1} parent=1 // pred_region
      %s19 = ssub.s32 128, 128
      %20 = vsyncadd [#allocation3], %s19
      %s21 = sshll.u32 [#allocation2], 4
      %s22 = int_to_ptr.vmem [resolvable:$true] %s21
      %27 = dma.hbm_to_vmem [thread:$0]  %s0, 128, %s22, [#allocation3], 64, 64, 4
    $region5: #{tpu_custom_call.1} parent=1 // pred_fallthru
      _
    // Predicated region
    $region6: #{tpu_custom_call.1} parent=1 // pred_check
      _
    $region7: #{tpu_custom_call.1} parent=1 // pred_check_branch
      %29 = sbr.rel (0) target = $region9
    $region8: #{tpu_custom_call.1} parent=1 // pred_region
      %s31 = ssub.s32 192, 192
      %32 = vsyncadd [#allocation6], %s31
      %s33 = sshll.u32 [#allocation5], 4
      %s34 = int_to_ptr.vmem [resolvable:$true] %s33
      %39 = dma.hbm_to_vmem [thread:$0]  %s1, 192, %s34, [#allocation6], 64, 64, 4
    $region9: #{tpu_custom_call.1} parent=1 // pred_fallthru
      _
    // Predicated region
    $region10: #{tpu_custom_call.1} parent=1 // pred_check
      _
    $region11: #{tpu_custom_call.1} parent=1 // pred_check_branch
      %41 = sbr.rel (0) target = $region13
    $region12: #{tpu_custom_call.1} parent=1 // pred_region
      _
    $region13: #{tpu_custom_call.1} parent=1 // pred_fallthru
      _
    // Predicated region
    $region14: #{tpu_custom_call.1} parent=1 // pred_check
      _
    $region15: #{tpu_custom_call.1} parent=1 // pred_check_branch
      %43 = sbr.rel (0) target = $region17
    $region16: #{tpu_custom_call.1} parent=1 // pred_region
      %s45 = ssub.s32 512, 512
      %46 = vsyncadd [#allocation6], %s45
      %s47 = sshll.u32 [#allocation7], 4
      %s48 = int_to_ptr.vmem [resolvable:$true] %s47
      %53 = dma.hbm_to_vmem [thread:$0]  %s3, 512, %s48, [#allocation6], 64, 64, 4
    $region17: #{tpu_custom_call.1} parent=1 // pred_fallthru
      _
    // Predicated region
    $region18: #{tpu_custom_call.1} parent=1 // pred_check
      _
    $region19: #{tpu_custom_call.1} parent=1 // pred_check_branch
      %55 = sbr.rel (0) target = $region21
    $region20: #{tpu_custom_call.1} parent=1 // pred_region
      _
    $region21: #{tpu_custom_call.1} parent=1 // pred_fallthru
      _
    // Predicated region
    $region22: #{tpu_custom_call.1} parent=1 // pred_check
      _
    $region23: #{tpu_custom_call.1} parent=1 // pred_check_branch
      %57 = sbr.rel (0) target = $region25
    $region24: #{tpu_custom_call.1} parent=1 // pred_region
      %s59 = ssub.s32 1024, 1024
      %60 = vsyncadd [#allocation9], %s59
      %s61 = sshll.u32 [#allocation8], 4
      %s62 = int_to_ptr.vmem [resolvable:$true] %s61
      %67 = dma.hbm_to_vmem [thread:$0]  %s5, 1024, %s62, [#allocation9], 64, 64, 4
    $region25: #{tpu_custom_call.1} parent=1 // pred_fallthru
      _
    // Predicated region
    $region26: #{tpu_custom_call.1} parent=1 // pred_check
      _
    $region27: #{tpu_custom_call.1} parent=1 // pred_check_branch
      %69 = sbr.rel (0) target = $region29
    $region28: #{tpu_custom_call.1} parent=1 // pred_region
      _
    $region29: #{tpu_custom_call.1} parent=1 // pred_fallthru
      _
    // Predicated region
    $region30: #{tpu_custom_call.1} parent=1 // pred_check
      _
    $region31: #{tpu_custom_call.1} parent=1 // pred_check_branch
      %71 = sbr.rel (0) target = $region33
    $region32: #{tpu_custom_call.1} parent=1 // pred_region
      %72 = dma.done [#allocation3], 128
    $region33: #{tpu_custom_call.1} parent=1 // pred_fallthru
      _
    // Predicated region
    $region34: #{tpu_custom_call.1} parent=1 // pred_check
      _
    $region35: #{tpu_custom_call.1} parent=1 // pred_check_branch
      %74 = sbr.rel (0) target = $region37
    $region36: #{tpu_custom_call.1} parent=1 // pred_region
      %75 = dma.done [#allocation6], 192
    $region37: #{tpu_custom_call.1} parent=1 // pred_fallthru
      _
    // Predicated region
    $region38: #{tpu_custom_call.1} parent=1 // pred_check
      _
    $region39: #{tpu_custom_call.1} parent=1 // pred_check_branch
      %77 = sbr.rel (0) target = $region41
    $region40: #{tpu_custom_call.1} parent=1 // pred_region
      %78 = dma.done [#allocation6], 512
    $region41: #{tpu_custom_call.1} parent=1 // pred_fallthru
      _
    // Predicated region
    $region42: #{tpu_custom_call.1} parent=1 // pred_check
      _
    $region43: #{tpu_custom_call.1} parent=1 // pred_check_branch
      %80 = sbr.rel (0) target = $region45
    $region44: #{tpu_custom_call.1} parent=1 // pred_region
      %81 = dma.done [#allocation9], 1024
    $region45: #{tpu_custom_call.1} parent=1 // pred_fallthru
      _
    %v83 = vld [vmem:[#allocation2] sm:$0xf]
    %v84 = vld [vmem:[#allocation2 + $0x4] sm:$0xf]
    %v85 = vld [vmem:[#allocation5] sm:$0xf]
    %v86 = vld [vmem:[#allocation5 + $0x4] sm:$0xf]
    %v87 = vld [vmem:[#allocation5 + $0x8] sm:$0x3]
    %v88 = vld [vmem:[%s2] sm:$0x1]
    %v90 = vlaneseq
    %v91 = vshrl.u32 %v90, 7
    %v92 = vsub.s32 0, %v91
    %v93 = vrot.slane %v88, %v92
    %v97 = vunpack.c.l.b16 %v83
    %v98 = vunpack.c.l.b16 %v84
    %v99 = vpack.c.b16 %v98, %v97
    %v103 = vunpack.c.l.b16 %v85
    %v104 = vunpack.c.l.b16 %v86
    %v105 = vunpack.c.l.b16 %v87
    %v106 = vpack.c.b16 %v104, %v103
    %v107 = vpack.c.b16 %v105, %v105
    %vm109 = vcmask 162816
    %v111 = vsel %vm109, %v99, 0
    %vm113 = vcmask 1041408
    %v115 = vsel %vm113, %v107, 0
    %117 = vmatprep.subr.bf16.mxu0 0
    %118 = vmatpush1.bf16.msra.mxu0 0
    %119 = vmatprep.subr.bf16.mxu0 0
    %120 = vmatpush1.bf16.msra.mxu0 0
    %121 = vmatprep.subr.bf16.mxu0 0
    %122 = vmatpush1.bf16.msra.mxu0 0
    %123 = vmatprep.subr.bf16.mxu0 0
    %124 = vmatpush1.bf16.msra.mxu0 0
    %125 = vmatprep.subr.bf16.mxu0 0
    %126 = vmatpush1.bf16.msra.mxu0 0
    %127 = vmatprep.subr.bf16.mxu0 0
    %128 = vmatpush1.bf16.msra.mxu0 0
    %129 = vmatprep.subr.bf16.mxu0 0
    %130 = vmatpush1.bf16.msra.mxu0 %v115
    %131 = vmatprep.subr.bf16.mxu0 0
    %132 = vmatpush1.bf16.msra.mxu0 %v106
    %133 = vmatprep.subr.bf16.mxu0 0
    %134 = vmatpush2.bf16.msra.mxu0 0
    %135 = vmatprep.subr.bf16.mxu0 0
    %136 = vmatpush2.bf16.msra.mxu0 0
    %137 = vmatprep.subr.bf16.mxu0 0
    %138 = vmatpush2.bf16.msra.mxu0 0
    %139 = vmatprep.subr.bf16.mxu0 0
    %140 = vmatpush2.bf16.msra.mxu0 0
    %141 = vmatprep.subr.bf16.mxu0 0
    %142 = vmatpush2.bf16.msra.mxu0 0
    %143 = vmatprep.subr.bf16.mxu0 0
    %144 = vmatpush2.bf16.msra.mxu0 0
    %145 = vmatprep.subr.bf16.mxu0 0
    %146 = vmatpush2.bf16.msra.mxu0 0
    %147 = vmatprep.subr.bf16.mxu0 0
    %148 = vmatpush2.bf16.msra.mxu0 0
    %149 = vmatprep.mubr.bf16.mxu0 0
    %150 = vmatmul.mubr.bf16.gmra.mxu0 %v111
    %v151 = vpop.f32.mrf.mxu0
    %v152 = vadd.f32 %v93, %v151
    %v153 = vpop.f32.mrf.mxu0
    %v154 = vpop.f32.mrf.mxu0
    %v155 = vadd.f32 %v93, %v154
    %v156 = vpop.f32.mrf.mxu0
    %157 = vdwg.mxu0
    %v158 = vmax.f32 %v152, 0.0
    %v159 = vmax.f32 %v155, 0.0
    %v160 = vpack.c.bf16 %v159, %v158
    %v161 = vld [vmem:[#allocation7] sm:$0xf]
    %v162 = vld [vmem:[#allocation7 + $0x4] sm:$0xf]
    %v163 = vld [vmem:[#allocation7 + $0x8] sm:$0xf]
    %v164 = vld [vmem:[#allocation7 + $0xc] sm:$0xf]
    %v165 = vld [vmem:[#allocation7 + $0x10] sm:$0xf]
    %v166 = vld [vmem:[#allocation7 + $0x14] sm:$0xf]
    %v167 = vld [vmem:[#allocation7 + $0x18] sm:$0xf]
    %v168 = vld [vmem:[#allocation7 + $0x1c] sm:$0xf]
    %v169 = vld [vmem:[%s4] sm:$0x1]
    %v171 = vlaneseq
    %v172 = vshrl.u32 %v171, 7
    %v173 = vsub.s32 0, %v172
    %v174 = vrot.slane %v169, %v173
    %v184 = vunpack.c.l.b16 %v161
    %v185 = vunpack.c.l.b16 %v162
    %v186 = vunpack.c.l.b16 %v163
    %v187 = vunpack.c.l.b16 %v164
    %v188 = vunpack.c.l.b16 %v165
    %v189 = vunpack.c.l.b16 %v166
    %v190 = vunpack.c.l.b16 %v167
    %v191 = vunpack.c.l.b16 %v168
    %v192 = vpack.c.b16 %v185, %v184
    %v193 = vpack.c.b16 %v187, %v186
    %v194 = vpack.c.b16 %v189, %v188
    %v195 = vpack.c.b16 %v191, %v190
    %vm200 = vcmask 523264
    %v202 = vsel %vm200, %v160, 0
    %204 = vmatprep.subr.bf16.mxu0 0
    %205 = vmatpush1.bf16.msra.mxu0 0
    %206 = vmatprep.subr.bf16.mxu0 0
    %207 = vmatpush1.bf16.msra.mxu0 0
    %208 = vmatprep.subr.bf16.mxu0 0
    %209 = vmatpush1.bf16.msra.mxu0 0
    %210 = vmatprep.subr.bf16.mxu0 0
    %211 = vmatpush1.bf16.msra.mxu0 0
    %212 = vmatprep.subr.bf16.mxu0 0
    %213 = vmatpush1.bf16.msra.mxu0 %v195
    %214 = vmatprep.subr.bf16.mxu0 0
    %215 = vmatpush1.bf16.msra.mxu0 %v194
    %216 = vmatprep.subr.bf16.mxu0 0
    %217 = vmatpush1.bf16.msra.mxu0 %v193
    %218 = vmatprep.subr.bf16.mxu0 0
    %219 = vmatpush1.bf16.msra.mxu0 %v192
    %220 = vmatprep.subr.bf16.mxu0 0
    %221 = vmatpush2.bf16.msra.mxu0 0
    %222 = vmatprep.subr.bf16.mxu0 0
    %223 = vmatpush2.bf16.msra.mxu0 0
    %224 = vmatprep.subr.bf16.mxu0 0
    %225 = vmatpush2.bf16.msra.mxu0 0
    %226 = vmatprep.subr.bf16.mxu0 0
    %227 = vmatpush2.bf16.msra.mxu0 0
    %228 = vmatprep.subr.bf16.mxu0 0
    %229 = vmatpush2.bf16.msra.mxu0 0
    %230 = vmatprep.subr.bf16.mxu0 0
    %231 = vmatpush2.bf16.msra.mxu0 0
    %232 = vmatprep.subr.bf16.mxu0 0
    %233 = vmatpush2.bf16.msra.mxu0 0
    %234 = vmatprep.subr.bf16.mxu0 0
    %235 = vmatpush2.bf16.msra.mxu0 0
    %236 = vmatprep.mubr.bf16.mxu0 0
    %237 = vmatmul.mubr.bf16.gmra.mxu0 %v202
    %v238 = vpop.f32.mrf.mxu0
    %v239 = vadd.f32 %v174, %v238
    %v240 = vpop.f32.mrf.mxu0
    %v241 = vpop.f32.mrf.mxu0
    %v242 = vadd.f32 %v174, %v241
    %v243 = vpop.f32.mrf.mxu0
    %244 = vdwg.mxu0
    %v245 = vmax.f32 %v239, 0.0
    %v246 = vmax.f32 %v242, 0.0
    %v247 = vpack.c.bf16 %v246, %v245
    %v248 = vld [vmem:[#allocation8] sm:$0xf]
    %v249 = vld [vmem:[#allocation8 + $0x4] sm:$0xf]
    %v250 = vld [vmem:[#allocation8 + $0x8] sm:$0xf]
    %v251 = vld [vmem:[#allocation8 + $0xc] sm:$0xf]
    %v252 = vld [vmem:[#allocation8 + $0x10] sm:$0xf]
    %v253 = vld [vmem:[#allocation8 + $0x14] sm:$0xf]
    %v254 = vld [vmem:[#allocation8 + $0x18] sm:$0xf]
    %v255 = vld [vmem:[#allocation8 + $0x1c] sm:$0xf]
    %v256 = vld [vmem:[#allocation8 + $0x20] sm:$0xf]
    %v257 = vld [vmem:[#allocation8 + $0x24] sm:$0xf]
    %v258 = vld [vmem:[#allocation8 + $0x28] sm:$0xf]
    %v259 = vld [vmem:[#allocation8 + $0x2c] sm:$0xf]
    %v260 = vld [vmem:[#allocation8 + $0x30] sm:$0xf]
    %v261 = vld [vmem:[#allocation8 + $0x34] sm:$0xf]
    %v262 = vld [vmem:[#allocation8 + $0x38] sm:$0xf]
    %v263 = vld [vmem:[#allocation8 + $0x3c] sm:$0xf]
    %v264 = vld [vmem:[%s6] sm:$0x1]
    %v266 = vlaneseq
    %v267 = vshrl.u32 %v266, 7
    %v268 = vsub.s32 0, %v267
    %v269 = vrot.slane %v264, %v268
    %v287 = vunpack.c.l.b16 %v248
    %v288 = vunpack.c.l.b16 %v249
    %v289 = vunpack.c.l.b16 %v250
    %v290 = vunpack.c.l.b16 %v251
    %v291 = vunpack.c.l.b16 %v252
    %v292 = vunpack.c.l.b16 %v253
    %v293 = vunpack.c.l.b16 %v254
    %v294 = vunpack.c.l.b16 %v255
    %v295 = vunpack.c.l.b16 %v256
    %v296 = vunpack.c.l.b16 %v257
    %v297 = vunpack.c.l.b16 %v258
    %v298 = vunpack.c.l.b16 %v259
    %v299 = vunpack.c.l.b16 %v260
    %v300 = vunpack.c.l.b16 %v261
    %v301 = vunpack.c.l.b16 %v262
    %v302 = vunpack.c.l.b16 %v263
    %v303 = vpack.c.b16 %v288, %v287
    %v304 = vpack.c.b16 %v290, %v289
    %v305 = vpack.c.b16 %v292, %v291
    %v306 = vpack.c.b16 %v294, %v293
    %v307 = vpack.c.b16 %v296, %v295
    %v308 = vpack.c.b16 %v298, %v297
    %v309 = vpack.c.b16 %v300, %v299
    %v310 = vpack.c.b16 %v302, %v301
    %319 = vmatprep.subr.bf16.mxu0 0
    %320 = vmatpush1.bf16.msra.mxu0 %v310
    %321 = vmatprep.subr.bf16.mxu0 0
    %322 = vmatpush1.bf16.msra.mxu0 %v309
    %323 = vmatprep.subr.bf16.mxu0 0
    %324 = vmatpush1.bf16.msra.mxu0 %v308
    %325 = vmatprep.subr.bf16.mxu0 0
    %326 = vmatpush1.bf16.msra.mxu0 %v307
    %327 = vmatprep.subr.bf16.mxu0 0
    %328 = vmatpush1.bf16.msra.mxu0 %v306
    %329 = vmatprep.subr.bf16.mxu0 0
    %330 = vmatpush1.bf16.msra.mxu0 %v305
    %331 = vmatprep.subr.bf16.mxu0 0
    %332 = vmatpush1.bf16.msra.mxu0 %v304
    %333 = vmatprep.subr.bf16.mxu0 0
    %334 = vmatpush1.bf16.msra.mxu0 %v303
    %335 = vmatprep.subr.bf16.mxu0 0
    %336 = vmatpush2.bf16.msra.mxu0 0
    %337 = vmatprep.subr.bf16.mxu0 0
    %338 = vmatpush2.bf16.msra.mxu0 0
    %339 = vmatprep.subr.bf16.mxu0 0
    %340 = vmatpush2.bf16.msra.mxu0 0
    %341 = vmatprep.subr.bf16.mxu0 0
    %342 = vmatpush2.bf16.msra.mxu0 0
    %343 = vmatprep.subr.bf16.mxu0 0
    %344 = vmatpush2.bf16.msra.mxu0 0
    %345 = vmatprep.subr.bf16.mxu0 0
    %346 = vmatpush2.bf16.msra.mxu0 0
    %347 = vmatprep.subr.bf16.mxu0 0
    %348 = vmatpush2.bf16.msra.mxu0 0
    %349 = vmatprep.subr.bf16.mxu0 0
    %350 = vmatpush2.bf16.msra.mxu0 0
    %351 = vmatprep.mubr.bf16.mxu0 0
    %352 = vmatmul.mubr.bf16.gmra.mxu0 %v247
    %v353 = vpop.f32.mrf.mxu0
    %v354 = vadd.f32 %v269, %v353
    %v355 = vpop.f32.mrf.mxu0
    %v356 = vpop.f32.mrf.mxu0
    %v357 = vadd.f32 %v269, %v356
    %v358 = vpop.f32.mrf.mxu0
    %359 = vdwg.mxu0
    %v360 = vtanh.pop %v354
    %v361 = vtanh.pop %v357
    %362 = vst [vmem:[#allocation10] sm:$0xff] %v360
    %363 = vst [vmem:[#allocation10 + $0x8] sm:$0xff] %v361
    // Predicated region
    $region46: #{tpu_custom_call.1} parent=1 // pred_check
      _
    $region47: #{tpu_custom_call.1} parent=1 // pred_check_branch
      %365 = sbr.rel (0) target = $region49
    $region48: #{tpu_custom_call.1} parent=1 // pred_region
      %s367 = ssub.s32 256, 256
      %368 = vsyncadd [#allocation4], %s367
      %s369 = sshll.u32 [#allocation10], 4
      %s370 = int_to_ptr.vmem [resolvable:$true] %s369
      %375 = dma.vmem_to_hbm [thread:$0]  %s370, 256, %s7, [#allocation4], 128, 128, 8
    $region49: #{tpu_custom_call.1} parent=1 // pred_fallthru
      _
    // Predicated region
    $region50: #{tpu_custom_call.1} parent=1 // pred_check
      _
    $region51: #{tpu_custom_call.1} parent=1 // pred_check_branch
      %377 = sbr.rel (0) target = $region53
    $region52: #{tpu_custom_call.1} parent=1 // pred_region
      %378 = dma.done [#allocation4], 256
    $region53: #{tpu_custom_call.1} parent=1 // pred_fallthru
      _
    %379 = vsyncpa [#allocation3], 1
    %380 = vsyncpa [#allocation6], 1
    %381 = vsyncpa [#allocation9], 1
    %382 = vsyncpa [#allocation4], 1

</llo_original>
